<compile_context>
chip_gen: v7x
topology: tpu7x:2x2x1
jax: 0.10.0
libtpu: 0.0.40
codegen_flags: <defaults>
</compile_context>

<pallas_src>
import math
from functools import partial

import jax
import jax.numpy as jnp
from jax.experimental import pallas as pl
from jax.experimental.pallas import tpu as pltpu


# ----------------------------------------------------------------------------
# In-kernel math helpers
# ----------------------------------------------------------------------------
_SQRT_HALF = 0.7071067811865476


def _erf(x):
    # Abramowitz & Stegun 7.1.26 rational approximation (max abs err ~1.5e-7):
    # keeps nn.GELU()'s exact-erf semantics inside Mosaic (no native erf lowering).
    p = 0.3275911
    a1, a2, a3, a4, a5 = (0.254829592, -0.284496736, 1.421413741,
                          -1.453152027, 1.061405429)
    ax = jnp.abs(x)
    t = 1.0 / (1.0 + p * ax)
    poly = ((((a5 * t + a4) * t + a3) * t + a2) * t + a1) * t
    y = 1.0 - poly * jnp.exp(-ax * ax)
    return jnp.where(x >= 0, y, -y)


def _gelu(x):
    return 0.5 * x * (1.0 + _erf(x * _SQRT_HALF))


# ----------------------------------------------------------------------------
# Pallas kernels
# ----------------------------------------------------------------------------
def _linear_kernel(x_ref, w_ref, b_ref, o_ref, *, act):
    h = jnp.dot(x_ref[...].astype(jnp.bfloat16), w_ref[...].astype(jnp.bfloat16),
                preferred_element_type=jnp.float32) + b_ref[...]
    if act == 'gelu':
        h = _gelu(h)
    o_ref[...] = h


def _linear_glu_kernel(x_ref, wv_ref, wg_ref, bv_ref, bg_ref, o_ref):
    # nn.GLU(dim=-1) on Linear(d, 2d): value/gate weights kept as separate lane-dense matmuls.
    xb = x_ref[...].astype(jnp.bfloat16)
    v = jnp.dot(xb, wv_ref[...].astype(jnp.bfloat16),
                preferred_element_type=jnp.float32) + bv_ref[...]
    g = jnp.dot(xb, wg_ref[...].astype(jnp.bfloat16),
                preferred_element_type=jnp.float32) + bg_ref[...]
    o_ref[...] = v * jax.nn.sigmoid(g)


def _ff2_res_ln_kernel(x_ref, w_ref, b_ref, r_ref, g_ref, beta_ref, o_ref):
    # LayerNorm(GELU(x @ w + b) + r): fuses ff2, GELU, residual add and LayerNorm.
    h = jnp.dot(x_ref[...].astype(jnp.bfloat16), w_ref[...].astype(jnp.bfloat16),
                preferred_element_type=jnp.float32) + b_ref[...]
    h = _gelu(h) + r_ref[...]
    mean = jnp.mean(h, axis=-1, keepdims=True)
    var = jnp.mean((h - mean) ** 2, axis=-1, keepdims=True)
    o_ref[...] = (h - mean) * jax.lax.rsqrt(var + 1e-5) * g_ref[...] + beta_ref[...]


def _gconv_kernel(u_ref, w_ref, o_ref):
    # H-batched: (H_blk,B,L) @ (H_blk,L,C*L) -> (H_blk,B,C*L); the Toeplitz operator already
    # encodes the bidirectional FFT conv + the D skip; GConv's GELU is fused in the epilogue.
    z = jnp.einsum('hbl,hlc->hbc',
                   u_ref[...].astype(jnp.bfloat16),
                   w_ref[...].astype(jnp.bfloat16),
                   preferred_element_type=jnp.float32)
    o_ref[...] = _gelu(z)


def _conv5_bias(xp_ref, w_ref, b_ref, L, Cout):
    # 5-tap conv as 5 shifted (L,Cin)@(Cin,Cout) matmuls on the in-VMEM padded strip.
    xp = xp_ref[0]                                   # (L+4, Cin) f32
    acc = jnp.zeros((L, Cout), jnp.float32)
    for t in range(5):
        acc = acc + jnp.dot(xp[t:t + L, :].astype(jnp.bfloat16),
                            w_ref[t].astype(jnp.bfloat16),
                            preferred_element_type=jnp.float32)
    return acc + b_ref[...]


def _gn_gelu(h, g_ref, beta_ref):
    # GroupNorm(1, C): per-sample stats over all (L, C) elements, then channel affine + GELU.
    n = h.shape[0] * h.shape[1]
    s = jnp.sum(h, axis=-1, keepdims=True)
    mean = jnp.sum(s, axis=0, keepdims=True) / n
    d = h - mean
    v = jnp.sum(jnp.sum(d * d, axis=-1, keepdims=True), axis=0, keepdims=True) / n
    hn = d * jax.lax.rsqrt(v + 1e-5) * g_ref[...] + beta_ref[...]
    return _gelu(hn)


def _conv5_gn_gelu_kernel(xp_ref, w_ref, b_ref, g_ref, beta_ref, o_ref):
    L, Cout = o_ref.shape[1], o_ref.shape[2]
    o_ref[0] = _gn_gelu(_conv5_bias(xp_ref, w_ref, b_ref, L, Cout), g_ref, beta_ref)


def _conv5_gn_gelu_skip_kernel(xp_ref, w_ref, b_ref, g_ref, beta_ref, skip_ref, o_ref):
    L, Cout = o_ref.shape[1], o_ref.shape[2]
    h = _gn_gelu(_conv5_bias(xp_ref, w_ref, b_ref, L, Cout), g_ref, beta_ref)
    o_ref[0] = h + skip_ref[0]


# ----------------------------------------------------------------------------
# Tiling helpers + Pallas wrappers
# ----------------------------------------------------------------------------
def _pick_tm(M, target=256):
    # Largest row tile that is a multiple of 8, divides M, and leaves >=2 grid steps
    # (megacore on v7x) while staying well under scoped VMEM on all chips.
    if M % 8 != 0:
        return M
    cap = min(target, M // 2 if M >= 16 else M)
    cap = max((cap // 8) * 8, 8)
    for tm in range(cap, 7, -8):
        if M % tm == 0:
            return tm
    return M


def _pick_hblk(H):
    if H < 2:
        return 1
    cap = min(16, max(H // 2, 1))
    for hb in range(cap, 0, -1):
        if H % hb == 0:
            return hb
    return 1


_PARALLEL1 = pltpu.CompilerParams(dimension_semantics=("parallel",))


def pallas_linear(x2d, w, b, act=None):
    M, K = x2d.shape
    N = w.shape[1]
    tm = _pick_tm(M)
    return pl.pallas_call(
        partial(_linear_kernel, act=act),
        grid=(M // tm,),
        in_specs=[pl.BlockSpec((tm, K), lambda i: (i, 0)),
                  pl.BlockSpec((K, N), lambda i: (0, 0)),
                  pl.BlockSpec((1, N), lambda i: (0, 0))],
        out_specs=pl.BlockSpec((tm, N), lambda i: (i, 0)),
        out_shape=jax.ShapeDtypeStruct((M, N), jnp.float32),
        compiler_params=_PARALLEL1,
        cost_estimate=pl.CostEstimate(flops=2 * M * K * N, transcendentals=0,
                                      bytes_accessed=4 * (M * K + K * N + M * N)),
    )(x2d, w, b.reshape(1, N))


def pallas_linear_glu(x2d, p):
    M, K = x2d.shape
    d = p['wv'].shape[1]
    tm = _pick_tm(M)
    return pl.pallas_call(
        _linear_glu_kernel,
        grid=(M // tm,),
        in_specs=[pl.BlockSpec((tm, K), lambda i: (i, 0)),
                  pl.BlockSpec((K, d), lambda i: (0, 0)),
                  pl.BlockSpec((K, d), lambda i: (0, 0)),
                  pl.BlockSpec((1, d), lambda i: (0, 0)),
                  pl.BlockSpec((1, d), lambda i: (0, 0))],
        out_specs=pl.BlockSpec((tm, d), lambda i: (i, 0)),
        out_shape=jax.ShapeDtypeStruct((M, d), jnp.float32),
        compiler_params=_PARALLEL1,
        cost_estimate=pl.CostEstimate(flops=4 * M * K * d, transcendentals=M * d,
                                      bytes_accessed=4 * (M * K + 2 * K * d + M * d)),
    )(x2d, p['wv'], p['wg'], p['bv'].reshape(1, d), p['bg'].reshape(1, d))


def pallas_ff2_res_ln(x2d, p_ff2, r2d, p_norm):
    M, K = x2d.shape
    N = p_ff2['w'].shape[1]
    tm = _pick_tm(M)
    return pl.pallas_call(
        _ff2_res_ln_kernel,
        grid=(M // tm,),
        in_specs=[pl.BlockSpec((tm, K), lambda i: (i, 0)),
                  pl.BlockSpec((K, N), lambda i: (0, 0)),
                  pl.BlockSpec((1, N), lambda i: (0, 0)),
                  pl.BlockSpec((tm, N), lambda i: (i, 0)),
                  pl.BlockSpec((1, N), lambda i: (0, 0)),
                  pl.BlockSpec((1, N), lambda i: (0, 0))],
        out_specs=pl.BlockSpec((tm, N), lambda i: (i, 0)),
        out_shape=jax.ShapeDtypeStruct((M, N), jnp.float32),
        compiler_params=_PARALLEL1,
        cost_estimate=pl.CostEstimate(flops=2 * M * K * N, transcendentals=2 * M * N,
                                      bytes_accessed=4 * (2 * M * K + K * N + M * N)),
    )(x2d, p_ff2['w'], p_ff2['b'].reshape(1, N), r2d,
      p_norm['g'].reshape(1, N), p_norm['b'].reshape(1, N))


def pallas_gconv_core(u_t, wt):
    # u_t: (H, B, L)   wt: (H, L, C*L)   ->   (H, B, C*L)  (GELU fused)
    H, B, L = u_t.shape
    CL = wt.shape[-1]
    hb = _pick_hblk(H)
    return pl.pallas_call(
        _gconv_kernel,
        grid=(H // hb,),
        in_specs=[pl.BlockSpec((hb, B, L), lambda h: (h, 0, 0)),
                  pl.BlockSpec((hb, L, CL), lambda h: (h, 0, 0))],
        out_specs=pl.BlockSpec((hb, B, CL), lambda h: (h, 0, 0)),
        out_shape=jax.ShapeDtypeStruct((H, B, CL), jnp.float32),
        compiler_params=_PARALLEL1,
        cost_estimate=pl.CostEstimate(
            flops=2 * H * B * L * CL, transcendentals=H * B * CL,
            bytes_accessed=4 * (H * B * L + H * L * CL + H * B * CL)),
    )(u_t, wt)


def pallas_conv5_gn_gelu(x, w5, b, g, beta, skip=None):
    # x: (B, L, Cin) channels-last; w5: (5, Cin, Cout).  Fused conv(k=5, pad=2) + bias +
    # GroupNorm(1, Cout) + GELU (+ optional residual), one batch element per grid step.
    # TODO(synk): for very long L the whole (L, C) plane must fit VMEM (GN needs global stats);
    # a two-pass L-tiled variant would be needed at production sequence lengths.
    B, L, Cin = x.shape
    Cout = w5.shape[-1]
    xp = jnp.pad(x, ((0, 0), (2, 2), (0, 0)))          # +4 rows only; no HBM im2col blowup
    args = [xp, w5, b.reshape(1, Cout), g.reshape(1, Cout), beta.reshape(1, Cout)]
    in_specs = [pl.BlockSpec((1, L + 4, Cin), lambda i: (i, 0, 0)),
                pl.BlockSpec((5, Cin, Cout), lambda i: (0, 0, 0)),
                pl.BlockSpec((1, Cout), lambda i: (0, 0)),
                pl.BlockSpec((1, Cout), lambda i: (0, 0)),
                pl.BlockSpec((1, Cout), lambda i: (0, 0))]
    if skip is None:
        kern = _conv5_gn_gelu_kernel
    else:
        kern = _conv5_gn_gelu_skip_kernel
        args.append(skip)
        in_specs.append(pl.BlockSpec((1, L, Cout), lambda i: (i, 0, 0)))
    return pl.pallas_call(
        kern,
        grid=(B,),
        in_specs=in_specs,
        out_specs=pl.BlockSpec((1, L, Cout), lambda i: (i, 0, 0)),
        out_shape=jax.ShapeDtypeStruct((B, L, Cout), jnp.float32),
        compiler_params=_PARALLEL1,
        cost_estimate=pl.CostEstimate(
            flops=2 * 5 * B * L * Cin * Cout, transcendentals=B * L * Cout,
            bytes_accessed=4 * (B * L * (Cin + 2 * Cout) + 5 * Cin * Cout)),
    )(*args)


# ----------------------------------------------------------------------------
# Plain-JAX glue
# ----------------------------------------------------------------------------
def apply_linear(x, p, act=None):
    shp = x.shape
    y = pallas_linear(x.reshape(-1, shp[-1]), p['w'], p['b'], act=act)
    return y.reshape(*shp[:-1], p['w'].shape[1])


def _interp_linear(x, scale):
    # Matches F.interpolate(mode='linear', align_corners=False) for integer scale_factor.
    if scale == 1:
        return x
    l_in = x.shape[-1]
    l_out = int(math.floor(l_in * scale))
    j = jnp.arange(l_out, dtype=jnp.float32)
    src = jnp.maximum((j + 0.5) / scale - 0.5, 0.0)
    i0 = jnp.floor(src).astype(jnp.int32)
    i1 = jnp.minimum(i0 + 1, l_in - 1)
    w = src - i0.astype(jnp.float32)
    return x[..., i0] * (1.0 - w) + x[..., i1] * w


# ----------------------------------------------------------------------------
# GConv (mode='cat_randn', bidirectional=True, transposed=False, linear=False)
# ----------------------------------------------------------------------------
def _build_gconv_operator(p, L):
    """Build (H, L, C*L) operator so that the FFT conv + D skip is a single matmul.

    y[b,c,h,l] = sum_{m<=l} u[b,h,m] k0[c,h,l-m] + sum_{m>l} u[b,h,m] k1[c,h,m-l-1]
                 + D[c,h] u[b,h,l]
    which equals irfft(rfft(u,2L)*rfft(k,2L))[:L] + u*D of the reference.
    TODO(synk): O(L^2) operator; for production l_max (2^14) an FFT path would be required.
    """
    C, h = p['C'], p['h']
    ns, init_scale, mult = p['num_scales'], p['init_scale'], p['multiplier']
    ks = []
    for i in range(ns):
        scale = 2 ** (max(0, i - 1) + init_scale)
        ks.append(_interp_linear(p['kernels'][i], scale) * (mult ** (ns - i - 1)))
    k = jnp.concatenate(ks, axis=-1)                                   # (2C, h, Lk)
    knorm = jnp.sqrt(jnp.sum(k * k, axis=-1, keepdims=True))           # norm BEFORE trunc/pad
    Lk = k.shape[-1]
    if Lk > L:
        k = k[..., :L]
    elif Lk < L:
        k = jnp.pad(k, ((0, 0), (0, 0), (0, L - Lk)))
    k = k / knorm
    k0, k1 = k[:C], k[C:]
    m = jnp.arange(L)[:, None]
    l = jnp.arange(L)[None, :]
    idx_c = jnp.clip(l - m, 0, L - 1)
    idx_a = jnp.clip(m - l - 1, 0, L - 1)
    Wc = jnp.take(k0, idx_c, axis=-1)                                  # (C, h, m, l)
    Wa = jnp.take(k1, idx_a, axis=-1)
    W = jnp.where((m <= l)[None, None], Wc, Wa)
    W = W + p['D'][:, :, None, None] * jnp.eye(L, dtype=W.dtype)[None, None]
    return jnp.transpose(W, (1, 2, 0, 3)).reshape(h, L, C * L)         # (H, L, C*L)


_GCONV_OP_CACHE = {}


def _get_gconv_operator(p, L):
    # Hoisted out of the per-forward path: depends only on params + L, so built once and reused.
    key = (id(p), int(L))
    op = _GCONV_OP_CACHE.get(key)
    if op is None:
        op = _build_gconv_operator(p, L)
        _GCONV_OP_CACHE[key] = op
    return op


def gconv_forward(x, p):
    # x: (B, L, H)  (GConv with transposed=False)
    B, L, H = x.shape
    C = p['C']
    u_t = jnp.transpose(x, (2, 0, 1))                 # (H, B, L): single transpose
    wt = _get_gconv_operator(p, L)                    # cached (H, L, C*L)
    z = pallas_gconv_core(u_t, wt)                    # (H, B, C*L), GConv GELU fused; dropout=0
    z = z.reshape(H, B, C, L)
    z = jnp.transpose(z, (1, 3, 2, 0)).reshape(B * L, C * H)   # '(c h)' feature order (c outer)
    y = pallas_linear(z, p['out']['w'], p['out']['b'])          # output_linear: C*H -> H
    return y.reshape(B, L, H)


def sgconv_block_forward(x_in, p):
    B, L, D = x_in.shape
    x2d = x_in.reshape(B * L, D)
    x = pallas_linear_glu(x2d, p['ff1'])                        # GLU(ff1(x))
    x = gconv_forward(x.reshape(B, L, D), p['gconv'])
    # gelu(ff2(x)) + x_in, then LayerNorm — fused into one kernel.
    y = pallas_ff2_res_ln(x.reshape(B * L, D), p['ff2'], x2d, p['norm'])
    return y.reshape(B, L, D)


# ----------------------------------------------------------------------------
# ResConvBlock / Downsample1d / Upsample1d
# TODO(synk): these classes are not defined in the provided source; implemented
# following the standard k-diffusion / sample-generator 1-D definitions.
# ----------------------------------------------------------------------------
def res_conv_block_forward(x, p):
    # x: (B, L, C); c_in == c_out so the skip is an identity; second conv kernel fuses the skip.
    h = pallas_conv5_gn_gelu(x, p['w1'], p['b1'], p['gn1_w'], p['gn1_b'])
    return pallas_conv5_gn_gelu(h, p['w2'], p['b2'], p['gn2_w'], p['gn2_b'], skip=x)


_CUBIC = jnp.array([-0.01171875, -0.03515625, 0.11328125, 0.43359375,
                    0.43359375, 0.11328125, -0.03515625, -0.01171875], jnp.float32)


def downsample1d(x):
    # TODO(synk): tiny depthwise cubic resampler left in lax.conv (memory-bound, negligible).
    h = jnp.transpose(x, (0, 2, 1))
    pad = _CUBIC.shape[0] // 2 - 1
    hp = jnp.pad(h, ((0, 0), (0, 0), (pad, pad)), mode='reflect')
    C = hp.shape[1]
    w = jnp.tile(_CUBIC[None, None, :], (C, 1, 1))
    y = jax.lax.conv_general_dilated(hp, w, window_strides=(2,), padding='VALID',
                                     feature_group_count=C,
                                     dimension_numbers=('NCH', 'OIH', 'NCH'))
    return jnp.transpose(y, (0, 2, 1))


def upsample1d(x):
    h = jnp.transpose(x, (0, 2, 1))
    k = _CUBIC * 2.0
    pad = k.shape[0] // 2 - 1
    hp = jnp.pad(h, ((0, 0), (0, 0), ((pad + 1) // 2, (pad + 1) // 2)), mode='reflect')
    C = hp.shape[1]
    w = jnp.tile(k[None, None, :], (C, 1, 1))
    y = jax.lax.conv_general_dilated(hp, w, window_strides=(1,), padding=[(0, 0)],
                                     lhs_dilation=(2,), feature_group_count=C,
                                     dimension_numbers=('NCH', 'OIH', 'NCH'))
    return jnp.transpose(y, (0, 2, 1))


# ----------------------------------------------------------------------------
# Parameter init (deterministic, synthetic) + GConvHybrid builder / forward
# ----------------------------------------------------------------------------
def init_linear(key, d_in, d_out):
    kw, kb = jax.random.split(key)
    lim = 1.0 / math.sqrt(d_in)
    return {'w': jax.random.uniform(kw, (d_in, d_out), jnp.float32, -lim, lim),
            'b': jax.random.uniform(kb, (d_out,), jnp.float32, -lim, lim)}


def init_linear_glu(key, d_in, d_out):
    # PyTorch: Linear(d_in, 2*d_out) followed by nn.GLU(dim=-1); value half first, gate second.
    p = init_linear(key, d_in, 2 * d_out)
    return {'wv': p['w'][:, :d_out], 'wg': p['w'][:, d_out:],
            'bv': p['b'][:d_out], 'bg': p['b'][d_out:]}


def init_gconv(key, h, channels, l_max, kernel_dim=64):
    C = channels
    C2 = 2 * C                                      # bidirectional doubles kernel channels
    num_scales = 1 + math.ceil(math.log2(l_max / kernel_dim))
    keys = jax.random.split(key, num_scales + 2)
    return {'D': jax.random.normal(keys[0], (C, h), jnp.float32),
            'kernels': [jax.random.normal(keys[1 + i], (C2, h, kernel_dim), jnp.float32)
                        for i in range(num_scales)],
            'out': init_linear(keys[-1], C * h, h),
            'h': h, 'C': C, 'num_scales': num_scales,
            'multiplier': 2.0, 'init_scale': 0}     # decay_min = decay_max = 2


def init_gconv_hybrid(key, data_dim, channels=2, depth=1, l_max=128):
    keys = iter(jax.random.split(key, 512))
    nk = lambda: next(keys)

    def resblock(d):
        c_mid = 2 * d
        w1 = jax.random.normal(nk(), (c_mid, d, 5), jnp.float32) / math.sqrt(5 * d)
        w2 = jax.random.normal(nk(), (d, c_mid, 5), jnp.float32) / math.sqrt(5 * c_mid)
        return ('resconv', {
            'w1': jnp.transpose(w1, (2, 1, 0)),      # prepacked (5, Cin, Cout) for the kernel
            'b1': jnp.zeros((c_mid,), jnp.float32),
            'gn1_w': jnp.ones((c_mid,), jnp.float32), 'gn1_b': jnp.zeros((c_mid,), jnp.float32),
            'w2': jnp.transpose(w2, (2, 1, 0)),
            'b2': jnp.zeros((d,), jnp.float32),
            'gn2_w': jnp.ones((d,), jnp.float32), 'gn2_b': jnp.zeros((d,), jnp.float32)})

    def sgblock(d, lm):
        return ('sgconv', {'ff1': init_linear_glu(nk(), d, d),
                           'ff2': init_linear(nk(), d, d),
                           'norm': {'g': jnp.ones((d,), jnp.float32),
                                    'b': jnp.zeros((d,), jnp.float32)},
                           'gconv': init_gconv(nk(), d, channels, lm)})

    dim, cur_l, max_l, min_l = data_dim, l_max, l_max, 128
    layers = []
    for i in range(depth):
        layers += [resblock(dim), sgblock(dim, cur_l), resblock(dim), sgblock(dim, cur_l)]
        if i % 2 == 0:
            layers.append(('linear', init_linear(nk(), dim, dim * 2))); dim *= 2
        layers.append(('down', None))
        cur_l = max(cur_l // 2, min_l)
    layers += [sgblock(dim, cur_l), resblock(dim), sgblock(dim, cur_l), resblock(dim)]   # mid
    for i in range(depth):
        layers.append(('up', None))
        cur_l = min(cur_l * 2, max_l)
        if i % 2 == 0:
            layers.append(('linear', init_linear(nk(), dim, dim // 2))); dim //= 2
        layers += [sgblock(dim, cur_l), resblock(dim), sgblock(dim, cur_l), resblock(dim)]
    return layers


def gconv_hybrid_forward(x, layers):
    for kind, p in layers:
        if kind == 'resconv':
            x = res_conv_block_forward(x, p)
        elif kind == 'sgconv':
            x = sgconv_block_forward(x, p)
        elif kind == 'linear':
            x = apply_linear(x, p)
        elif kind == 'down':
            x = downsample1d(x)
        elif kind == 'up':
            x = upsample1d(x)
    return x


# ----------------------------------------------------------------------------
if __name__ == "__main__":
    key = jax.random.PRNGKey(0)
    k_param, k_x = jax.random.split(key)

    B, L, data_dim = 2, 32, 8          # small shapes; l_max=128 >= L
    layers = init_gconv_hybrid(k_param, data_dim, channels=2, depth=1, l_max=128)
    x = jax.random.normal(k_x, (B, L, data_dim), jnp.float32)

    y = gconv_hybrid_forward(x, layers)
    y = jax.block_until_ready(y)
    assert y.shape == (B, L, data_dim)
    assert bool(jnp.all(jnp.isfinite(y)))
    print("KERNEL_OK")
</pallas_src>

<mosaic_0001>
module attributes {stable_mosaic.version = 11 : i64} {
  func.func @_conv5_gn_gelu_kernel(%arg0: i32, %arg1: memref<1x36x8xf32, #tpu.memory_space<vmem>>, %arg2: memref<5x8x16xf32, #tpu.memory_space<vmem>>, %arg3: memref<1x16xf32, #tpu.memory_space<vmem>>, %arg4: memref<1x16xf32, #tpu.memory_space<vmem>>, %arg5: memref<1x16xf32, #tpu.memory_space<vmem>>, %arg6: memref<1x32x16xf32, #tpu.memory_space<vmem>>) attributes {dimension_semantics = [#tpu.dimension_semantics<parallel>], iteration_bounds = array<i64: 2>, scalar_prefetch = 0 : i64, scratch_operands = 0 : i64, tpu.core_type = #tpu.core_type<tc>, window_params = [{transform_indices = @transform_0, window_bounds = array<i64: 1, 36, 8>}, {pipeline_mode = #tpu.pipeline_mode<synchronous>, transform_indices = @transform_1, window_bounds = array<i64: 5, 8, 16>}, {pipeline_mode = #tpu.pipeline_mode<synchronous>, transform_indices = @transform_2, window_bounds = array<i64: 1, 16>}, {pipeline_mode = #tpu.pipeline_mode<synchronous>, transform_indices = @transform_3, window_bounds = array<i64: 1, 16>}, {pipeline_mode = #tpu.pipeline_mode<synchronous>, transform_indices = @transform_4, window_bounds = array<i64: 1, 16>}, {transform_indices = @transform_5, window_bounds = array<i64: 1, 32, 16>}]} {
    %c0 = arith.constant 0 : index
    %c0_0 = arith.constant 0 : index
    %c0_1 = arith.constant 0 : index
    %0 = vector.load %arg1[%c0, %c0_0, %c0_1] : memref<1x36x8xf32, #tpu.memory_space<vmem>>, vector<1x36x8xf32>
    %1 = vector.shape_cast %0 : vector<1x36x8xf32> to vector<36x8xf32>
    %cst = arith.constant 0.000000e+00 : f32
    %2 = vector.broadcast %cst : f32 to vector<32x16xf32>
    %3 = vector.extract_strided_slice %1 {offsets = [0, 0], sizes = [32, 8], strides = [1, 1]} : vector<36x8xf32> to vector<32x8xf32>
    %4 = arith.truncf %3 : vector<32x8xf32> to vector<32x8xbf16>
    %c0_2 = arith.constant 0 : index
    %c0_3 = arith.constant 0 : index
    %c0_4 = arith.constant 0 : index
    %5 = vector.load %arg2[%c0_2, %c0_3, %c0_4] : memref<5x8x16xf32, #tpu.memory_space<vmem>>, vector<1x8x16xf32>
    %6 = vector.shape_cast %5 : vector<1x8x16xf32> to vector<8x16xf32>
    %7 = arith.truncf %6 : vector<8x16xf32> to vector<8x16xbf16>
    %cst_5 = arith.constant dense<0.000000e+00> : vector<32x16xf32>
    %8 = tpu.matmul %4, %7, %cst_5 {dimension_numbers = #tpu.dot_dimension_numbers<[1], [0], [0], [1], [0, 0, 1, 1], [], []>} : vector<32x8xbf16>, vector<8x16xbf16>, vector<32x16xf32> -> vector<32x16xf32>
    %9 = arith.addf %2, %8 : vector<32x16xf32>
    %10 = vector.extract_strided_slice %1 {offsets = [1, 0], sizes = [32, 8], strides = [1, 1]} : vector<36x8xf32> to vector<32x8xf32>
    %11 = arith.truncf %10 : vector<32x8xf32> to vector<32x8xbf16>
    %c1 = arith.constant 1 : index
    %c0_6 = arith.constant 0 : index
    %c0_7 = arith.constant 0 : index
    %12 = vector.load %arg2[%c1, %c0_6, %c0_7] : memref<5x8x16xf32, #tpu.memory_space<vmem>>, vector<1x8x16xf32>
    %13 = vector.shape_cast %12 : vector<1x8x16xf32> to vector<8x16xf32>
    %14 = arith.truncf %13 : vector<8x16xf32> to vector<8x16xbf16>
    %cst_8 = arith.constant dense<0.000000e+00> : vector<32x16xf32>
    %15 = tpu.matmul %11, %14, %cst_8 {dimension_numbers = #tpu.dot_dimension_numbers<[1], [0], [0], [1], [0, 0, 1, 1], [], []>} : vector<32x8xbf16>, vector<8x16xbf16>, vector<32x16xf32> -> vector<32x16xf32>
    %16 = arith.addf %9, %15 : vector<32x16xf32>
    %17 = vector.extract_strided_slice %1 {offsets = [2, 0], sizes = [32, 8], strides = [1, 1]} : vector<36x8xf32> to vector<32x8xf32>
    %18 = arith.truncf %17 : vector<32x8xf32> to vector<32x8xbf16>
    %c2 = arith.constant 2 : index
    %c0_9 = arith.constant 0 : index
    %c0_10 = arith.constant 0 : index
    %19 = vector.load %arg2[%c2, %c0_9, %c0_10] : memref<5x8x16xf32, #tpu.memory_space<vmem>>, vector<1x8x16xf32>
    %20 = vector.shape_cast %19 : vector<1x8x16xf32> to vector<8x16xf32>
    %21 = arith.truncf %20 : vector<8x16xf32> to vector<8x16xbf16>
    %cst_11 = arith.constant dense<0.000000e+00> : vector<32x16xf32>
    %22 = tpu.matmul %18, %21, %cst_11 {dimension_numbers = #tpu.dot_dimension_numbers<[1], [0], [0], [1], [0, 0, 1, 1], [], []>} : vector<32x8xbf16>, vector<8x16xbf16>, vector<32x16xf32> -> vector<32x16xf32>
    %23 = arith.addf %16, %22 : vector<32x16xf32>
    %24 = vector.extract_strided_slice %1 {offsets = [3, 0], sizes = [32, 8], strides = [1, 1]} : vector<36x8xf32> to vector<32x8xf32>
    %25 = arith.truncf %24 : vector<32x8xf32> to vector<32x8xbf16>
    %c3 = arith.constant 3 : index
    %c0_12 = arith.constant 0 : index
    %c0_13 = arith.constant 0 : index
    %26 = vector.load %arg2[%c3, %c0_12, %c0_13] : memref<5x8x16xf32, #tpu.memory_space<vmem>>, vector<1x8x16xf32>
    %27 = vector.shape_cast %26 : vector<1x8x16xf32> to vector<8x16xf32>
    %28 = arith.truncf %27 : vector<8x16xf32> to vector<8x16xbf16>
    %cst_14 = arith.constant dense<0.000000e+00> : vector<32x16xf32>
    %29 = tpu.matmul %25, %28, %cst_14 {dimension_numbers = #tpu.dot_dimension_numbers<[1], [0], [0], [1], [0, 0, 1, 1], [], []>} : vector<32x8xbf16>, vector<8x16xbf16>, vector<32x16xf32> -> vector<32x16xf32>
    %30 = arith.addf %23, %29 : vector<32x16xf32>
    %31 = vector.extract_strided_slice %1 {offsets = [4, 0], sizes = [32, 8], strides = [1, 1]} : vector<36x8xf32> to vector<32x8xf32>
    %32 = arith.truncf %31 : vector<32x8xf32> to vector<32x8xbf16>
    %c4 = arith.constant 4 : index
    %c0_15 = arith.constant 0 : index
    %c0_16 = arith.constant 0 : index
    %33 = vector.load %arg2[%c4, %c0_15, %c0_16] : memref<5x8x16xf32, #tpu.memory_space<vmem>>, vector<1x8x16xf32>
    %34 = vector.shape_cast %33 : vector<1x8x16xf32> to vector<8x16xf32>
    %35 = arith.truncf %34 : vector<8x16xf32> to vector<8x16xbf16>
    %cst_17 = arith.constant dense<0.000000e+00> : vector<32x16xf32>
    %36 = tpu.matmul %32, %35, %cst_17 {dimension_numbers = #tpu.dot_dimension_numbers<[1], [0], [0], [1], [0, 0, 1, 1], [], []>} : vector<32x8xbf16>, vector<8x16xbf16>, vector<32x16xf32> -> vector<32x16xf32>
    %37 = arith.addf %30, %36 : vector<32x16xf32>
    %c0_18 = arith.constant 0 : index
    %c0_19 = arith.constant 0 : index
    %38 = vector.load %arg3[%c0_18, %c0_19] : memref<1x16xf32, #tpu.memory_space<vmem>>, vector<1x16xf32>
    %39 = vector.broadcast %38 : vector<1x16xf32> to vector<32x16xf32>
    %40 = arith.addf %37, %39 : vector<32x16xf32>
    %cst_20 = arith.constant dense<0.000000e+00> : vector<32xf32>
    %41 = vector.multi_reduction <add>, %40, %cst_20 [1] : vector<32x16xf32> to vector<32xf32>
    %42 = vector.shape_cast %41 : vector<32xf32> to vector<32x1xf32>
    %cst_21 = arith.constant dense<0.000000e+00> : vector<1xf32>
    %43 = vector.multi_reduction <add>, %42, %cst_21 [0] : vector<32x1xf32> to vector<1xf32>
    %44 = vector.shape_cast %43 : vector<1xf32> to vector<1x1xf32>
    %cst_22 = arith.constant 5.120000e+02 : f32
    %45 = vector.broadcast %cst_22 : f32 to vector<1x1xf32>
    %46 = arith.divf %44, %45 : vector<1x1xf32>
    %47 = vector.broadcast %46 : vector<1x1xf32> to vector<32x16xf32>
    %48 = arith.subf %40, %47 : vector<32x16xf32>
    %49 = arith.mulf %48, %48 : vector<32x16xf32>
    %cst_23 = arith.constant dense<0.000000e+00> : vector<32xf32>
    %50 = vector.multi_reduction <add>, %49, %cst_23 [1] : vector<32x16xf32> to vector<32xf32>
    %51 = vector.shape_cast %50 : vector<32xf32> to vector<32x1xf32>
    %cst_24 = arith.constant dense<0.000000e+00> : vector<1xf32>
    %52 = vector.multi_reduction <add>, %51, %cst_24 [0] : vector<32x1xf32> to vector<1xf32>
    %53 = vector.shape_cast %52 : vector<1xf32> to vector<1x1xf32>
    %cst_25 = arith.constant 5.120000e+02 : f32
    %54 = vector.broadcast %cst_25 : f32 to vector<1x1xf32>
    %55 = arith.divf %53, %54 : vector<1x1xf32>
    %cst_26 = arith.constant 9.99999974E-6 : f32
    %56 = vector.broadcast %cst_26 : f32 to vector<1x1xf32>
    %57 = arith.addf %55, %56 : vector<1x1xf32>
    %58 = math.rsqrt %57 : vector<1x1xf32>
    %59 = vector.broadcast %58 : vector<1x1xf32> to vector<32x16xf32>
    %60 = arith.mulf %48, %59 : vector<32x16xf32>
    %c0_27 = arith.constant 0 : index
    %c0_28 = arith.constant 0 : index
    %61 = vector.load %arg4[%c0_27, %c0_28] : memref<1x16xf32, #tpu.memory_space<vmem>>, vector<1x16xf32>
    %62 = vector.broadcast %61 : vector<1x16xf32> to vector<32x16xf32>
    %63 = arith.mulf %60, %62 : vector<32x16xf32>
    %c0_29 = arith.constant 0 : index
    %c0_30 = arith.constant 0 : index
    %64 = vector.load %arg5[%c0_29, %c0_30] : memref<1x16xf32, #tpu.memory_space<vmem>>, vector<1x16xf32>
    %65 = vector.broadcast %64 : vector<1x16xf32> to vector<32x16xf32>
    %66 = arith.addf %63, %65 : vector<32x16xf32>
    %cst_31 = arith.constant 5.000000e-01 : f32
    %67 = vector.broadcast %cst_31 : f32 to vector<32x16xf32>
    %68 = arith.mulf %67, %66 : vector<32x16xf32>
    %cst_32 = arith.constant 0.707106769 : f32
    %69 = vector.broadcast %cst_32 : f32 to vector<32x16xf32>
    %70 = arith.mulf %66, %69 : vector<32x16xf32>
    %71 = math.absf %70 : vector<32x16xf32>
    %cst_33 = arith.constant 0.327591091 : f32
    %72 = vector.broadcast %cst_33 : f32 to vector<32x16xf32>
    %73 = arith.mulf %72, %71 : vector<32x16xf32>
    %cst_34 = arith.constant 1.000000e+00 : f32
    %74 = vector.broadcast %cst_34 : f32 to vector<32x16xf32>
    %75 = arith.addf %74, %73 : vector<32x16xf32>
    %cst_35 = arith.constant 1.000000e+00 : f32
    %76 = vector.broadcast %cst_35 : f32 to vector<32x16xf32>
    %77 = arith.divf %76, %75 : vector<32x16xf32>
    %cst_36 = arith.constant 1.06140542 : f32
    %78 = vector.broadcast %cst_36 : f32 to vector<32x16xf32>
    %79 = arith.mulf %78, %77 : vector<32x16xf32>
    %cst_37 = arith.constant -1.45315206 : f32
    %80 = vector.broadcast %cst_37 : f32 to vector<32x16xf32>
    %81 = arith.addf %79, %80 : vector<32x16xf32>
    %82 = arith.mulf %81, %77 : vector<32x16xf32>
    %cst_38 = arith.constant 1.42141378 : f32
    %83 = vector.broadcast %cst_38 : f32 to vector<32x16xf32>
    %84 = arith.addf %82, %83 : vector<32x16xf32>
    %85 = arith.mulf %84, %77 : vector<32x16xf32>
    %cst_39 = arith.constant -0.284496725 : f32
    %86 = vector.broadcast %cst_39 : f32 to vector<32x16xf32>
    %87 = arith.addf %85, %86 : vector<32x16xf32>
    %88 = arith.mulf %87, %77 : vector<32x16xf32>
    %cst_40 = arith.constant 0.254829586 : f32
    %89 = vector.broadcast %cst_40 : f32 to vector<32x16xf32>
    %90 = arith.addf %88, %89 : vector<32x16xf32>
    %91 = arith.mulf %90, %77 : vector<32x16xf32>
    %cst_41 = arith.constant 0.000000e+00 : f32
    %92 = vector.broadcast %cst_41 : f32 to vector<32x16xf32>
    %93 = arith.subf %92, %71 : vector<32x16xf32>
    %94 = arith.mulf %93, %71 : vector<32x16xf32>
    %95 = math.exp %94 : vector<32x16xf32>
    %96 = arith.mulf %91, %95 : vector<32x16xf32>
    %cst_42 = arith.constant 1.000000e+00 : f32
    %97 = vector.broadcast %cst_42 : f32 to vector<32x16xf32>
    %98 = arith.subf %97, %96 : vector<32x16xf32>
    %cst_43 = arith.constant 0.000000e+00 : f32
    %99 = vector.broadcast %cst_43 : f32 to vector<32x16xf32>
    %100 = arith.cmpf oge, %70, %99 : vector<32x16xf32>
    %cst_44 = arith.constant 0.000000e+00 : f32
    %101 = vector.broadcast %cst_44 : f32 to vector<32x16xf32>
    %102 = arith.subf %101, %98 : vector<32x16xf32>
    %103 = arith.select %100, %98, %102 : vector<32x16xi1>, vector<32x16xf32>
    %cst_45 = arith.constant 1.000000e+00 : f32
    %104 = vector.broadcast %cst_45 : f32 to vector<32x16xf32>
    %105 = arith.addf %104, %103 : vector<32x16xf32>
    %106 = arith.mulf %68, %105 : vector<32x16xf32>
    %c0_46 = arith.constant 0 : index
    %c0_47 = arith.constant 0 : index
    %c0_48 = arith.constant 0 : index
    %107 = vector.load %arg6[%c0_46, %c0_47, %c0_48] : memref<1x32x16xf32, #tpu.memory_space<vmem>>, vector<1x32x16xf32>
    %108 = vector.shape_cast %107 : vector<1x32x16xf32> to vector<32x16xf32>
    %109 = vector.shape_cast %106 : vector<32x16xf32> to vector<1x32x16xf32>
    tpu.vector_store %arg6[%c0_46, %c0_47, %c0_48], %109 {strides = array<i32>} : memref<1x32x16xf32, #tpu.memory_space<vmem>>, vector<1x32x16xf32>,
    return
  }
  func.func @transform_0(%arg0: i32) -> (i32, i32, i32) {
    %c0_i32 = arith.constant 0 : i32
    %c0_i32_0 = arith.constant 0 : i32
    %c0_i32_1 = arith.constant 0 : i32
    return %arg0, %c0_i32, %c0_i32_0 : i32, i32, i32
  }
  func.func @transform_1(%arg0: i32) -> (i32, i32, i32) {
    %c0_i32 = arith.constant 0 : i32
    %c0_i32_0 = arith.constant 0 : i32
    %c0_i32_1 = arith.constant 0 : i32
    %c0_i32_2 = arith.constant 0 : i32
    return %c0_i32, %c0_i32_0, %c0_i32_1 : i32, i32, i32
  }
  func.func @transform_2(%arg0: i32) -> (i32, i32) {
    %c0_i32 = arith.constant 0 : i32
    %c0_i32_0 = arith.constant 0 : i32
    %c0_i32_1 = arith.constant 0 : i32
    return %c0_i32, %c0_i32_0 : i32, i32
  }
  func.func @transform_3(%arg0: i32) -> (i32, i32) {
    %c0_i32 = arith.constant 0 : i32
    %c0_i32_0 = arith.constant 0 : i32
    %c0_i32_1 = arith.constant 0 : i32
    return %c0_i32, %c0_i32_0 : i32, i32
  }
  func.func @transform_4(%arg0: i32) -> (i32, i32) {
    %c0_i32 = arith.constant 0 : i32
    %c0_i32_0 = arith.constant 0 : i32
    %c0_i32_1 = arith.constant 0 : i32
    return %c0_i32, %c0_i32_0 : i32, i32
  }
  func.func @transform_5(%arg0: i32) -> (i32, i32, i32) {
    %c0_i32 = arith.constant 0 : i32
    %c0_i32_0 = arith.constant 0 : i32
    %c0_i32_1 = arith.constant 0 : i32
    return %arg0, %c0_i32, %c0_i32_0 : i32, i32, i32
  }
}

</mosaic_0001>

<llo_original>
// kernel: tpu_custom_call.1
$region0: #{tpu_custom_call.1}
  #allocation0 [shape = 'u32[]', space=smem, size = 0x4, offset = 0x4, fixed_abs, tag = 'smem constant byte address 0x4 - core index']
  #allocation1 [shape = 'u32[144,128]{1,0:T(1,128)}', space=vmem, size = 0x12000, scoped, tag = 'internal scratch']
  %s0 = inlined_call_operand.vmem [shape: f32[2,36,8], index: 0, kind: input, shape index: {}]
  %s1 = inlined_call_operand.vmem [shape: f32[5,8,16], index: 1, kind: input, shape index: {}]
  %s2 = inlined_call_operand.vmem [shape: f32[1,16], index: 2, kind: input, shape index: {}]
  %s3 = inlined_call_operand.vmem [shape: f32[1,16], index: 3, kind: input, shape index: {}]
  %s4 = inlined_call_operand.vmem [shape: f32[1,16], index: 4, kind: input, shape index: {}]
  %s5 = inlined_call_operand.vmem [shape: f32[2,32,16], index: 5, kind: output, shape index: {}]
  %s6 = sld [smem:[#allocation0]]
  $region53: #{tpu_custom_call.1} parent=0
    _
  %s8 = ssub.s32 1, %s6
  %s9 = scalar_select 0, %s8, %s6
  loop: start=0, step=1, limit=4
  $region2: #{tpu_custom_call.1} parent=0 // loop_pre_header
    _
  $region3: #{tpu_custom_call.1} parent=0 // loop_header
    %s11 = sphi 0, %s15
    %p12 = scmp.ge.s32.totalorder %s11, 4
    %s21 = sphi 0, %s23
    %s24 = sphi 0, %s21
    %s25 = sphi 0, %s24
    %s41 = sphi 0, %s25
    %s45 = sphi 0, %s45
    %s47 = sphi 0, %s45
    %s48 = sphi 0, %s47
    %s62 = sphi 0, %s48
    %s66 = sphi 0, %s66
    %s68 = sphi 0, %s66
    %s69 = sphi 0, %s68
    %s83 = sphi 0, %s69
    %s87 = sphi 0, %s87
    %s89 = sphi 0, %s87
    %s90 = sphi 0, %s89
    %s104 = sphi 0, %s90
    %s108 = sphi 0, %s108
    %s110 = sphi 0, %s108
    %s111 = sphi 0, %s110
    %s125 = sphi 0, %s111
    %s131 = sphi 0, %s133
    %s134 = sphi 0, %s131
    %s135 = sphi 0, %s134
    %s151 = sphi 0, %s135
  $region4: #{tpu_custom_call.1} parent=0 // loop_header_branch
    %14 = sbr.rel (%p12) target = $region8
  $region5: #{tpu_custom_call.1} parent=0 // loop_body
    %s16 = ssub.s32 %s11, 1
    %s17 = ssub.s32 %s11, 2
    %s18 = sadd.s32 %s11, 1
    %s19 = ssub.s32 %s11, %s18
    %p20 = scmp.eq.s32.totalorder %s19, 0
    %s22 = sadd.s32 %s21, 1
    %s23 = scalar_select %p20, %s21, %s22
    %p26 = pneg %p20
    %p27 = scmp.eq.s32.totalorder %s11, 1
    %p28 = por %p26, %p27
    %p29 = scmp.ne.s32.totalorder %s21, %s24
    %p30 = scmp.eq.s32.totalorder %s11, 0
    %p31 = por %p29, %p30
    %p32 = scmp.ne.s32.totalorder %s21, %s24
    %p33 = scmp.eq.s32.totalorder %s16, 1
    %p34 = por %p32, %p33
    %p35 = scmp.ne.s32.totalorder %s24, %s25
    %p36 = scmp.eq.s32.totalorder %s16, 0
    %p37 = por %p35, %p36
    %p38 = scmp.ne.s32.totalorder %s24, %s25
    %p39 = scmp.eq.s32.totalorder %s17, 1
    %p40 = por %p38, %p39
    %p42 = scmp.ne.s32.totalorder %s25, %s41
    %p43 = scmp.eq.s32.totalorder %s17, 0
    %p44 = por %p42, %p43
    %s46 = sadd.s32 %s45, 1
    %p49 = scmp.eq.s32.totalorder %s11, 1
    %p50 = scmp.ne.s32.totalorder %s45, %s47
    %p51 = scmp.eq.s32.totalorder %s11, 0
    %p52 = por %p50, %p51
    %p53 = scmp.ne.s32.totalorder %s45, %s47
    %p54 = scmp.eq.s32.totalorder %s16, 1
    %p55 = por %p53, %p54
    %p56 = scmp.ne.s32.totalorder %s47, %s48
    %p57 = scmp.eq.s32.totalorder %s16, 0
    %p58 = por %p56, %p57
    %p59 = scmp.ne.s32.totalorder %s47, %s48
    %p60 = scmp.eq.s32.totalorder %s17, 1
    %p61 = por %p59, %p60
    %p63 = scmp.ne.s32.totalorder %s48, %s62
    %p64 = scmp.eq.s32.totalorder %s17, 0
    %p65 = por %p63, %p64
    %s67 = sadd.s32 %s66, 1
    %p70 = scmp.eq.s32.totalorder %s11, 1
    %p71 = scmp.ne.s32.totalorder %s66, %s68
    %p72 = scmp.eq.s32.totalorder %s11, 0
    %p73 = por %p71, %p72
    %p74 = scmp.ne.s32.totalorder %s66, %s68
    %p75 = scmp.eq.s32.totalorder %s16, 1
    %p76 = por %p74, %p75
    %p77 = scmp.ne.s32.totalorder %s68, %s69
    %p78 = scmp.eq.s32.totalorder %s16, 0
    %p79 = por %p77, %p78
    %p80 = scmp.ne.s32.totalorder %s68, %s69
    %p81 = scmp.eq.s32.totalorder %s17, 1
    %p82 = por %p80, %p81
    %p84 = scmp.ne.s32.totalorder %s69, %s83
    %p85 = scmp.eq.s32.totalorder %s17, 0
    %p86 = por %p84, %p85
    %s88 = sadd.s32 %s87, 1
    %p91 = scmp.eq.s32.totalorder %s11, 1
    %p92 = scmp.ne.s32.totalorder %s87, %s89
    %p93 = scmp.eq.s32.totalorder %s11, 0
    %p94 = por %p92, %p93
    %p95 = scmp.ne.s32.totalorder %s87, %s89
    %p96 = scmp.eq.s32.totalorder %s16, 1
    %p97 = por %p95, %p96
    %p98 = scmp.ne.s32.totalorder %s89, %s90
    %p99 = scmp.eq.s32.totalorder %s16, 0
    %p100 = por %p98, %p99
    %p101 = scmp.ne.s32.totalorder %s89, %s90
    %p102 = scmp.eq.s32.totalorder %s17, 1
    %p103 = por %p101, %p102
    %p105 = scmp.ne.s32.totalorder %s90, %s104
    %p106 = scmp.eq.s32.totalorder %s17, 0
    %p107 = por %p105, %p106
    %s109 = sadd.s32 %s108, 1
    %p112 = scmp.eq.s32.totalorder %s11, 1
    %p113 = scmp.ne.s32.totalorder %s108, %s110
    %p114 = scmp.eq.s32.totalorder %s11, 0
    %p115 = por %p113, %p114
    %p116 = scmp.ne.s32.totalorder %s108, %s110
    %p117 = scmp.eq.s32.totalorder %s16, 1
    %p118 = por %p116, %p117
    %p119 = scmp.ne.s32.totalorder %s110, %s111
    %p120 = scmp.eq.s32.totalorder %s16, 0
    %p121 = por %p119, %p120
    %p122 = scmp.ne.s32.totalorder %s110, %s111
    %p123 = scmp.eq.s32.totalorder %s17, 1
    %p124 = por %p122, %p123
    %p126 = scmp.ne.s32.totalorder %s111, %s125
    %p127 = scmp.eq.s32.totalorder %s17, 0
    %p128 = por %p126, %p127
    %s129 = ssub.s32 %s11, %s18
    %p130 = scmp.eq.s32.totalorder %s129, 0
    %s132 = sadd.s32 %s131, 1
    %s133 = scalar_select %p130, %s131, %s132
    %p136 = pneg %p130
    %p137 = scmp.eq.s32.totalorder %s11, 1
    %p138 = por %p136, %p137
    %p139 = scmp.ne.s32.totalorder %s131, %s134
    %p140 = scmp.eq.s32.totalorder %s11, 0
    %p141 = por %p139, %p140
    %p142 = scmp.ne.s32.totalorder %s131, %s134
    %p143 = scmp.eq.s32.totalorder %s16, 1
    %p144 = por %p142, %p143
    %p145 = scmp.ne.s32.totalorder %s134, %s135
    %p146 = scmp.eq.s32.totalorder %s16, 0
    %p147 = por %p145, %p146
    %p148 = scmp.ne.s32.totalorder %s134, %s135
    %p149 = scmp.eq.s32.totalorder %s17, 1
    %p150 = por %p148, %p149
    %p152 = scmp.ne.s32.totalorder %s135, %s151
    %p153 = scmp.eq.s32.totalorder %s17, 0
    %p154 = por %p152, %p153
    %p155 = scmp.le.s32.totalorder 1, %s11
    %p156 = scmp.lt.s32.totalorder %s11, 3
    %p157 = pnand %p155, %p156
    %p158 = pneg %p157
    // Predicated region
    $region9: #{tpu_custom_call.1} parent=5 // pred_check
      _
    $region10: #{tpu_custom_call.1} parent=5 // pred_check_branch
      %160 = sbr.rel (%p157) target = $region12
    $region11: #{tpu_custom_call.1} parent=5 // pred_region
      %s161 = ssub.s32 %s11, 1
      // Predicated region
      $region13: #{tpu_custom_call.1} parent=11 // pred_check
        %p162 = pneg %p58
      $region14: #{tpu_custom_call.1} parent=11 // pred_check_branch
        %164 = sbr.rel (%p162) target = $region16
      $region15: #{tpu_custom_call.1} parent=11 // pred_region
        _
      $region16: #{tpu_custom_call.1} parent=11 // pred_fallthru
        _
      // Predicated region
      $region17: #{tpu_custom_call.1} parent=11 // pred_check
        %p165 = pneg %p79
      $region18: #{tpu_custom_call.1} parent=11 // pred_check_branch
        %167 = sbr.rel (%p165) target = $region20
      $region19: #{tpu_custom_call.1} parent=11 // pred_region
        _
      $region20: #{tpu_custom_call.1} parent=11 // pred_fallthru
        _
      // Predicated region
      $region21: #{tpu_custom_call.1} parent=11 // pred_check
        %p168 = pneg %p100
      $region22: #{tpu_custom_call.1} parent=11 // pred_check_branch
        %170 = sbr.rel (%p168) target = $region24
      $region23: #{tpu_custom_call.1} parent=11 // pred_region
        _
      $region24: #{tpu_custom_call.1} parent=11 // pred_fallthru
        _
      // Predicated region
      $region25: #{tpu_custom_call.1} parent=11 // pred_check
        %p171 = pneg %p121
      $region26: #{tpu_custom_call.1} parent=11 // pred_check_branch
        %173 = sbr.rel (%p171) target = $region28
      $region27: #{tpu_custom_call.1} parent=11 // pred_region
        _
      $region28: #{tpu_custom_call.1} parent=11 // pred_fallthru
        _
    $region12: #{tpu_custom_call.1} parent=5 // pred_fallthru
      _
    %p174 = scmp.lt.s32.totalorder %s11, 2
    // Predicated region
    $region29: #{tpu_custom_call.1} parent=5 // pred_check
      %p175 = pneg %p174
    $region30: #{tpu_custom_call.1} parent=5 // pred_check_branch
      %177 = sbr.rel (%p175) target = $region32
    $region31: #{tpu_custom_call.1} parent=5 // pred_region
      // Predicated region
      $region33: #{tpu_custom_call.1} parent=31 // pred_check
        %p178 = pneg %p31
      $region34: #{tpu_custom_call.1} parent=31 // pred_check_branch
        %180 = sbr.rel (%p178) target = $region36
      $region35: #{tpu_custom_call.1} parent=31 // pred_region
        %p181 = scmp.lt.s32.totalorder %s11, 1
        %s182 = scalar_select %p181, %s11, 1
        %s183 = smul.addr %s182, 5
        %s184 = smul.addr %s183, 8
        %s185 = scalar_lea.vmem %s0, %s184
      $region36: #{tpu_custom_call.1} parent=31 // pred_fallthru
        _
    $region32: #{tpu_custom_call.1} parent=5 // pred_fallthru
      _
    %p186 = scmp.le.s32.totalorder 1, %s11
    %p187 = scmp.lt.s32.totalorder %s11, 3
    %p188 = pnand %p186, %p187
    %p189 = pneg %p188
    // Predicated region
    $region37: #{tpu_custom_call.1} parent=5 // pred_check
      _
    $region38: #{tpu_custom_call.1} parent=5 // pred_check_branch
      %191 = sbr.rel (%p188) target = $region40
    $region39: #{tpu_custom_call.1} parent=5 // pred_region
      %s192 = ssub.s32 %s11, 1
      %p193 = scmp.lt.s32.totalorder %s16, 1
      %s194 = scalar_select %p193, %s16, 1
      %s195 = smul.addr %s194, 5
      %s196 = smul.addr %s195, 8
      %s197 = scalar_lea.vmem %s0, %s196
      %p198 = pneg %p37
      %p199 = pneg %p34
      %p200 = pneg %p58
      %p201 = pneg %p55
      %p202 = pneg %p79
      %p203 = pneg %p76
      %p204 = pneg %p100
      %p205 = pneg %p97
      %p206 = pneg %p121
      %p207 = pneg %p118
      %p208 = pneg %p147
      %p209 = pneg %p144
      %p210 = scmp.lt.s32.totalorder %s16, 1
      %s211 = scalar_select %p210, %s16, 1
      %s212 = smul.addr %s211, 4
      %s213 = smul.addr %s212, 8
      %s214 = scalar_lea.vmem %s5, %s213
      %p215 = scmp.lt.s32.totalorder %s16, 1
      %s216 = scalar_select %p215, %s16, 1
      %s217 = smul.addr %s216, 5
      %s218 = smul.addr %s217, 8
      %s219 = scalar_lea.vmem %s0, %s218
      %p220 = scmp.lt.s32.totalorder %s16, 1
      %s221 = scalar_select %p220, %s16, 1
      %s222 = smul.addr %s221, 4
      %s223 = smul.addr %s222, 8
      %s224 = scalar_lea.vmem %s5, %s223
      %v226 = vld [vmem:[%s219] sm:$0xff]
      %v227 = vld [vmem:[%s219 + $0x8] sm:$0xff]
      %v228 = vld [vmem:[%s219 + $0x10] sm:$0xff]
      %v229 = vld [vmem:[%s219 + $0x18] sm:$0xff]
      %v230 = vld [vmem:[%s219 + $0x20] sm:$0xf]
      %v231 = vpack.c.bf16 %v227, %v226
      %v232 = vpack.c.bf16 %v229, %v228
      %v233 = vld [vmem:[%s1] sm:$0xff]
      %v234 = vpack.c.bf16 %v233, %v233
      %v235 = vpack.c.bf16 %v230, %v230
      %s236 = scalar_lea.vmem %s1, 8
      %v237 = vld [vmem:[%s236] sm:$0xff]
      %v238 = vpack.c.bf16 %v237, %v237
      %vm239 = vsmask.f32 7424
      %v241 = vshrl.u32 %v231, 16
      %v243 = vshll.u32 %v231, 16
      %v245 = vrot.slane %v243, 1
      %v246 = vor.u32 %v241, %v245
      %v248 = vshll.u32 %v232, 16
      %v250 = vrot.slane %v248, 1
      %v251 = vsel %vm239, %v246, %v250
      %v252 = vshrl.u32 %v232, 16
      %v254 = vor.u32 %v252, %v250
      %v256 = vshll.u32 %v235, 16
      %v258 = vrot.slane %v256, 1
      %v259 = vsel %vm239, %v254, %v258
      %vm260 = vcmask 64512
      %v262 = vsel %vm260, %v251, 0
      %v265 = vsel %vm260, %v259, 0
      %vm267 = vcmask 1043456
      %v269 = vsel %vm267, %v238, 0
      %271 = vmatprep.subr.bf16.mxu0 0
      %272 = vmatpush1.bf16.msra.mxu0 %v269
      %273 = vmatprep.subr.bf16.mxu0 0
      %274 = vmatpush1.bf16.msra.mxu0 0
      %275 = vmatprep.subr.bf16.mxu0 0
      %276 = vmatpush1.bf16.msra.mxu0 0
      %277 = vmatprep.subr.bf16.mxu0 0
      %278 = vmatpush1.bf16.msra.mxu0 0
      %279 = vmatprep.subr.bf16.mxu0 0
      %280 = vmatpush1.bf16.msra.mxu0 0
      %281 = vmatprep.subr.bf16.mxu0 0
      %282 = vmatpush1.bf16.msra.mxu0 0
      %283 = vmatprep.subr.bf16.mxu0 0
      %284 = vmatpush1.bf16.msra.mxu0 0
      %285 = vmatprep.subr.bf16.mxu0 0
      %286 = vmatpush1.bf16.msra.mxu0 0
      %287 = vmatprep.subr.bf16.mxu0 0
      %288 = vmatpush1.bf16.msra.mxu0 0
      %289 = vmatprep.subr.bf16.mxu0 0
      %290 = vmatpush1.bf16.msra.mxu0 0
      %291 = vmatprep.subr.bf16.mxu0 0
      %292 = vmatpush1.bf16.msra.mxu0 0
      %293 = vmatprep.subr.bf16.mxu0 0
      %294 = vmatpush1.bf16.msra.mxu0 0
      %295 = vmatprep.subr.bf16.mxu0 0
      %296 = vmatpush1.bf16.msra.mxu0 0
      %297 = vmatprep.subr.bf16.mxu0 0
      %298 = vmatpush1.bf16.msra.mxu0 0
      %299 = vmatprep.subr.bf16.mxu0 0
      %300 = vmatpush1.bf16.msra.mxu0 0
      %301 = vmatprep.subr.bf16.mxu0 0
      %302 = vmatpush1.bf16.msra.mxu0 0
      %303 = vmatprep.mubr.bf16.mxu0 0
      %304 = vmatmul.mubr.bf16.gmra.mrb[0].mxu0 %v262
      %v305 = vpop.f32.mrb[0].mxu0
      %v306 = vadd.f32 0.0, %v305
      %v307 = vpop.f32.mrb[0].mxu0
      %v308 = vpop.f32.mrb[0].mxu0
      %v309 = vadd.f32 0.0, %v308
      %v310 = vpop.f32.mrb[0].mxu0
      %311 = vmatprep.mubr.bf16.mxu0 0
      %312 = vmatmul.mubr.bf16.gmra.mrb[0].mxu0 %v265
      %v313 = vpop.f32.mrb[0].mxu0
      %v314 = vadd.f32 0.0, %v313
      %v315 = vpop.f32.mrb[0].mxu0
      %v316 = vpop.f32.mrb[0].mxu0
      %v317 = vadd.f32 0.0, %v316
      %v318 = vpop.f32.mrb[0].mxu0
      %319 = vdwg.mxu0
      %v320 = vsel %vm260, %v231, 0
      %v322 = vsel %vm260, %v232, 0
      %v325 = vsel %vm267, %v234, 0
      %327 = vmatprep.subr.bf16.mxu0 0
      %328 = vmatpush1.bf16.msra.mxu0 %v325
      %329 = vmatprep.subr.bf16.mxu0 0
      %330 = vmatpush1.bf16.msra.mxu0 0
      %331 = vmatprep.subr.bf16.mxu0 0
      %332 = vmatpush1.bf16.msra.mxu0 0
      %333 = vmatprep.subr.bf16.mxu0 0
      %334 = vmatpush1.bf16.msra.mxu0 0
      %335 = vmatprep.subr.bf16.mxu0 0
      %336 = vmatpush1.bf16.msra.mxu0 0
      %337 = vmatprep.subr.bf16.mxu0 0
      %338 = vmatpush1.bf16.msra.mxu0 0
      %339 = vmatprep.subr.bf16.mxu0 0
      %340 = vmatpush1.bf16.msra.mxu0 0
      %341 = vmatprep.subr.bf16.mxu0 0
      %342 = vmatpush1.bf16.msra.mxu0 0
      %343 = vmatprep.subr.bf16.mxu0 0
      %344 = vmatpush1.bf16.msra.mxu0 0
      %345 = vmatprep.subr.bf16.mxu0 0
      %346 = vmatpush1.bf16.msra.mxu0 0
      %347 = vmatprep.subr.bf16.mxu0 0
      %348 = vmatpush1.bf16.msra.mxu0 0
      %349 = vmatprep.subr.bf16.mxu0 0
      %350 = vmatpush1.bf16.msra.mxu0 0
      %351 = vmatprep.subr.bf16.mxu0 0
      %352 = vmatpush1.bf16.msra.mxu0 0
      %353 = vmatprep.subr.bf16.mxu0 0
      %354 = vmatpush1.bf16.msra.mxu0 0
      %355 = vmatprep.subr.bf16.mxu0 0
      %356 = vmatpush1.bf16.msra.mxu0 0
      %357 = vmatprep.subr.bf16.mxu0 0
      %358 = vmatpush1.bf16.msra.mxu0 0
      %359 = vmatprep.mubr.bf16.mxu0 0
      %360 = vmatmul.mubr.bf16.gmra.mrb[0].mxu0 %v320
      %v361 = vpop.f32.mrb[0].mxu0
      %v362 = vadd.f32 %v306, %v361
      %v363 = vpop.f32.mrb[0].mxu0
      %v364 = vpop.f32.mrb[0].mxu0
      %v365 = vadd.f32 %v309, %v364
      %v366 = vpop.f32.mrb[0].mxu0
      %367 = vmatprep.mubr.bf16.mxu0 0
      %368 = vmatmul.mubr.bf16.gmra.mrb[0].mxu0 %v322
      %v369 = vpop.f32.mrb[0].mxu0
      %v370 = vadd.f32 %v314, %v369
      %v371 = vpop.f32.mrb[0].mxu0
      %v372 = vpop.f32.mrb[0].mxu0
      %v373 = vadd.f32 %v317, %v372
      %v374 = vpop.f32.mrb[0].mxu0
      %375 = vdwg.mxu0
      %s376 = scalar_lea.vmem %s1, 16
      %v377 = vld [vmem:[%s376] sm:$0xff]
      %v378 = vpack.c.bf16 %v377, %v377
      %vm382 = vcmask 1046528
      %v383 = vrot.slane %v231, 1
      %v384 = vrot.slane %v232, 1
      %v385 = vsel %vm382, %v383, %v384
      %v386 = vrot.slane %v235, 1
      %v387 = vsel %vm382, %v384, %v386
      %v389 = vsel %vm260, %v385, 0
      %v392 = vsel %vm260, %v387, 0
      %v395 = vsel %vm267, %v378, 0
      %397 = vmatprep.subr.bf16.mxu0 0
      %398 = vmatpush1.bf16.msra.mxu0 %v395
      %399 = vmatprep.subr.bf16.mxu0 0
      %400 = vmatpush1.bf16.msra.mxu0 0
      %401 = vmatprep.subr.bf16.mxu0 0
      %402 = vmatpush1.bf16.msra.mxu0 0
      %403 = vmatprep.subr.bf16.mxu0 0
      %404 = vmatpush1.bf16.msra.mxu0 0
      %405 = vmatprep.subr.bf16.mxu0 0
      %406 = vmatpush1.bf16.msra.mxu0 0
      %407 = vmatprep.subr.bf16.mxu0 0
      %408 = vmatpush1.bf16.msra.mxu0 0
      %409 = vmatprep.subr.bf16.mxu0 0
      %410 = vmatpush1.bf16.msra.mxu0 0
      %411 = vmatprep.subr.bf16.mxu0 0
      %412 = vmatpush1.bf16.msra.mxu0 0
      %413 = vmatprep.subr.bf16.mxu0 0
      %414 = vmatpush1.bf16.msra.mxu0 0
      %415 = vmatprep.subr.bf16.mxu0 0
      %416 = vmatpush1.bf16.msra.mxu0 0
      %417 = vmatprep.subr.bf16.mxu0 0
      %418 = vmatpush1.bf16.msra.mxu0 0
      %419 = vmatprep.subr.bf16.mxu0 0
      %420 = vmatpush1.bf16.msra.mxu0 0
      %421 = vmatprep.subr.bf16.mxu0 0
      %422 = vmatpush1.bf16.msra.mxu0 0
      %423 = vmatprep.subr.bf16.mxu0 0
      %424 = vmatpush1.bf16.msra.mxu0 0
      %425 = vmatprep.subr.bf16.mxu0 0
      %426 = vmatpush1.bf16.msra.mxu0 0
      %427 = vmatprep.subr.bf16.mxu0 0
      %428 = vmatpush1.bf16.msra.mxu0 0
      %429 = vmatprep.mubr.bf16.mxu0 0
      %430 = vmatmul.mubr.bf16.gmra.mrb[0].mxu0 %v389
      %v431 = vpop.f32.mrb[0].mxu0
      %v432 = vadd.f32 0.0, %v431
      %v433 = vpop.f32.mrb[0].mxu0
      %v434 = vpop.f32.mrb[0].mxu0
      %v435 = vadd.f32 0.0, %v434
      %v436 = vpop.f32.mrb[0].mxu0
      %437 = vmatprep.mubr.bf16.mxu0 0
      %438 = vmatmul.mubr.bf16.gmra.mrb[0].mxu0 %v392
      %v439 = vpop.f32.mrb[0].mxu0
      %v440 = vadd.f32 0.0, %v439
      %v441 = vpop.f32.mrb[0].mxu0
      %v442 = vpop.f32.mrb[0].mxu0
      %v443 = vadd.f32 0.0, %v442
      %v444 = vpop.f32.mrb[0].mxu0
      %445 = vdwg.mxu0
      %v446 = vadd.f32 %v362, %v432
      %v447 = vadd.f32 %v365, %v435
      %v448 = vadd.f32 %v370, %v440
      %v449 = vadd.f32 %v373, %v443
      %s450 = scalar_lea.vmem %s1, 24
      %v451 = vld [vmem:[%s450] sm:$0xff]
      %v452 = vpack.c.bf16 %v451, %v451
      %vm453 = vsmask.f32 6400
      %v454 = vrot.slane %v241, 1
      %v455 = vrot.slane %v243, 2
      %v456 = vor.u32 %v454, %v455
      %v457 = vrot.slane %v252, 1
      %v458 = vrot.slane %v248, 2
      %v459 = vor.u32 %v457, %v458
      %v460 = vsel %vm453, %v456, %v459
      %v461 = vshrl.u32 %v235, 16
      %v463 = vrot.slane %v461, 1
      %v464 = vrot.slane %v256, 2
      %v465 = vor.u32 %v463, %v464
      %v466 = vsel %vm453, %v459, %v465
      %v468 = vsel %vm260, %v460, 0
      %v471 = vsel %vm260, %v466, 0
      %v474 = vsel %vm267, %v452, 0
      %476 = vmatprep.subr.bf16.mxu0 0
      %477 = vmatpush1.bf16.msra.mxu0 %v474
      %478 = vmatprep.subr.bf16.mxu0 0
      %479 = vmatpush1.bf16.msra.mxu0 0
      %480 = vmatprep.subr.bf16.mxu0 0
      %481 = vmatpush1.bf16.msra.mxu0 0
      %482 = vmatprep.subr.bf16.mxu0 0
      %483 = vmatpush1.bf16.msra.mxu0 0
      %484 = vmatprep.subr.bf16.mxu0 0
      %485 = vmatpush1.bf16.msra.mxu0 0
      %486 = vmatprep.subr.bf16.mxu0 0
      %487 = vmatpush1.bf16.msra.mxu0 0
      %488 = vmatprep.subr.bf16.mxu0 0
      %489 = vmatpush1.bf16.msra.mxu0 0
      %490 = vmatprep.subr.bf16.mxu0 0
      %491 = vmatpush1.bf16.msra.mxu0 0
      %492 = vmatprep.subr.bf16.mxu0 0
      %493 = vmatpush1.bf16.msra.mxu0 0
      %494 = vmatprep.subr.bf16.mxu0 0
      %495 = vmatpush1.bf16.msra.mxu0 0
      %496 = vmatprep.subr.bf16.mxu0 0
      %497 = vmatpush1.bf16.msra.mxu0 0
      %498 = vmatprep.subr.bf16.mxu0 0
      %499 = vmatpush1.bf16.msra.mxu0 0
      %500 = vmatprep.subr.bf16.mxu0 0
      %501 = vmatpush1.bf16.msra.mxu0 0
      %502 = vmatprep.subr.bf16.mxu0 0
      %503 = vmatpush1.bf16.msra.mxu0 0
      %504 = vmatprep.subr.bf16.mxu0 0
      %505 = vmatpush1.bf16.msra.mxu0 0
      %506 = vmatprep.subr.bf16.mxu0 0
      %507 = vmatpush1.bf16.msra.mxu0 0
      %508 = vmatprep.mubr.bf16.mxu0 0
      %509 = vmatmul.mubr.bf16.gmra.mrb[0].mxu0 %v468
      %v510 = vpop.f32.mrb[0].mxu0
      %v511 = vadd.f32 0.0, %v510
      %v512 = vpop.f32.mrb[0].mxu0
      %v513 = vpop.f32.mrb[0].mxu0
      %v514 = vadd.f32 0.0, %v513
      %v515 = vpop.f32.mrb[0].mxu0
      %516 = vmatprep.mubr.bf16.mxu0 0
      %517 = vmatmul.mubr.bf16.gmra.mrb[0].mxu0 %v471
      %v518 = vpop.f32.mrb[0].mxu0
      %v519 = vadd.f32 0.0, %v518
      %v520 = vpop.f32.mrb[0].mxu0
      %v521 = vpop.f32.mrb[0].mxu0
      %v522 = vadd.f32 0.0, %v521
      %v523 = vpop.f32.mrb[0].mxu0
      %524 = vdwg.mxu0
      %v525 = vadd.f32 %v446, %v511
      %v526 = vadd.f32 %v447, %v514
      %v527 = vadd.f32 %v448, %v519
      %v528 = vadd.f32 %v449, %v522
      %s529 = scalar_lea.vmem %s1, 32
      %v530 = vld [vmem:[%s529] sm:$0xff]
      %v531 = vpack.c.bf16 %v530, %v530
      %vm532 = vcmask 1045504
      %v533 = vrot.slane %v231, 2
      %v534 = vrot.slane %v232, 2
      %v535 = vsel %vm532, %v533, %v534
      %v536 = vrot.slane %v235, 2
      %v537 = vsel %vm532, %v534, %v536
      %v539 = vsel %vm260, %v535, 0
      %v542 = vsel %vm260, %v537, 0
      %v545 = vsel %vm267, %v531, 0
      %547 = vmatprep.subr.bf16.mxu0 0
      %548 = vmatpush1.bf16.msra.mxu0 %v545
      %549 = vmatprep.subr.bf16.mxu0 0
      %550 = vmatpush1.bf16.msra.mxu0 0
      %551 = vmatprep.subr.bf16.mxu0 0
      %552 = vmatpush1.bf16.msra.mxu0 0
      %553 = vmatprep.subr.bf16.mxu0 0
      %554 = vmatpush1.bf16.msra.mxu0 0
      %555 = vmatprep.subr.bf16.mxu0 0
      %556 = vmatpush1.bf16.msra.mxu0 0
      %557 = vmatprep.subr.bf16.mxu0 0
      %558 = vmatpush1.bf16.msra.mxu0 0
      %559 = vmatprep.subr.bf16.mxu0 0
      %560 = vmatpush1.bf16.msra.mxu0 0
      %561 = vmatprep.subr.bf16.mxu0 0
      %562 = vmatpush1.bf16.msra.mxu0 0
      %563 = vmatprep.subr.bf16.mxu0 0
      %564 = vmatpush1.bf16.msra.mxu0 0
      %565 = vmatprep.subr.bf16.mxu0 0
      %566 = vmatpush1.bf16.msra.mxu0 0
      %567 = vmatprep.subr.bf16.mxu0 0
      %568 = vmatpush1.bf16.msra.mxu0 0
      %569 = vmatprep.subr.bf16.mxu0 0
      %570 = vmatpush1.bf16.msra.mxu0 0
      %571 = vmatprep.subr.bf16.mxu0 0
      %572 = vmatpush1.bf16.msra.mxu0 0
      %573 = vmatprep.subr.bf16.mxu0 0
      %574 = vmatpush1.bf16.msra.mxu0 0
      %575 = vmatprep.subr.bf16.mxu0 0
      %576 = vmatpush1.bf16.msra.mxu0 0
      %577 = vmatprep.subr.bf16.mxu0 0
      %578 = vmatpush1.bf16.msra.mxu0 0
      %579 = vmatprep.mubr.bf16.mxu0 0
      %580 = vmatmul.mubr.bf16.gmra.mrb[0].mxu0 %v539
      %v581 = vpop.f32.mrb[0].mxu0
      %v582 = vadd.f32 0.0, %v581
      %v583 = vpop.f32.mrb[0].mxu0
      %v584 = vpop.f32.mrb[0].mxu0
      %v585 = vadd.f32 0.0, %v584
      %v586 = vpop.f32.mrb[0].mxu0
      %587 = vmatprep.mubr.bf16.mxu0 0
      %588 = vmatmul.mubr.bf16.gmra.mrb[0].mxu0 %v542
      %v589 = vpop.f32.mrb[0].mxu0
      %v590 = vadd.f32 0.0, %v589
      %v591 = vpop.f32.mrb[0].mxu0
      %v592 = vpop.f32.mrb[0].mxu0
      %v593 = vadd.f32 0.0, %v592
      %v594 = vpop.f32.mrb[0].mxu0
      %595 = vdwg.mxu0
      %v596 = vadd.f32 %v525, %v582
      %v597 = vadd.f32 %v526, %v585
      %v598 = vadd.f32 %v527, %v590
      %v599 = vadd.f32 %v528, %v593
      %v600 = vld [vmem:[%s2] sm:$0x1]
      %v602 = vlaneseq
      %v603 = vshrl.u32 %v602, 7
      %v604 = vsub.s32 0, %v603
      %v605 = vrot.slane %v600, %v604
      %v607 = vadd.f32 %v596, %v605
      %v608 = vadd.f32 %v597, %v605
      %v609 = vadd.f32 %v598, %v605
      %v610 = vadd.f32 %v599, %v605
      %vm611 = vcmask 130048
      %v612 = vsel %vm611, %v607, 0.0
      %613 = vadd.xlane.f32.xlu0 %v612
      %v614 = vpop.xlane.xlu0 %613
      %v615 = vsel %vm611, %v608, 0.0
      %616 = vadd.xlane.f32.xlu0 %v615
      %v617 = vpop.xlane.xlu0 %616
      %v618 = vsel %vm611, %v609, 0.0
      %619 = vadd.xlane.f32.xlu0 %v618
      %v620 = vpop.xlane.xlu0 %619
      %v621 = vsel %vm611, %v610, 0.0
      %622 = vadd.xlane.f32.xlu0 %v621
      %v623 = vpop.xlane.xlu0 %622
      %v624 = vadd.f32 %v614, %v617
      %v625 = vadd.f32 %v624, %v620
      %v626 = vadd.f32 %v625, %v623
      %v627 = vrot.slane %v626, 4
      %v628 = vadd.f32 %v626, %v627
      %v629 = vrot.slane %v628, 2
      %v630 = vadd.f32 %v628, %v629
      %v631 = vrot.slane %v630, 1
      %v632 = vadd.f32 %v630, %v631
      %v633 = vrcp.pop 512.0
      %v634 = vmul.f32 %v632, %v633
      %v635 = vsub.f32 %v607, %v634
      %v636 = vsub.f32 %v608, %v634
      %v637 = vsub.f32 %v609, %v634
      %v638 = vsub.f32 %v610, %v634
      %v639 = vmul.f32 %v635, %v635
      %v640 = vmul.f32 %v636, %v636
      %v641 = vmul.f32 %v637, %v637
      %v642 = vmul.f32 %v638, %v638
      %v643 = vsel %vm611, %v639, 0.0
      %644 = vadd.xlane.f32.xlu0 %v643
      %v645 = vpop.xlane.xlu0 %644
      %v646 = vsel %vm611, %v640, 0.0
      %647 = vadd.xlane.f32.xlu0 %v646
      %v648 = vpop.xlane.xlu0 %647
      %v649 = vsel %vm611, %v641, 0.0
      %650 = vadd.xlane.f32.xlu0 %v649
      %v651 = vpop.xlane.xlu0 %650
      %v652 = vsel %vm611, %v642, 0.0
      %653 = vadd.xlane.f32.xlu0 %v652
      %v654 = vpop.xlane.xlu0 %653
      %v655 = vadd.f32 %v645, %v648
      %v656 = vadd.f32 %v655, %v651
      %v657 = vadd.f32 %v656, %v654
      %v658 = vrot.slane %v657, 4
      %v659 = vadd.f32 %v657, %v658
      %v660 = vrot.slane %v659, 2
      %v661 = vadd.f32 %v659, %v660
      %v662 = vrot.slane %v661, 1
      %v663 = vadd.f32 %v661, %v662
      %v664 = vmul.f32 %v663, %v633
      %v665 = vadd.f32 %v664, 1e-05
      %v666 = vrsqrt.pop %v665
      %v667 = vmul.f32 %v635, %v666
      %v668 = vmul.f32 %v636, %v666
      %v669 = vmul.f32 %v637, %v666
      %v670 = vmul.f32 %v638, %v666
      %v671 = vld [vmem:[%s3] sm:$0x1]
      %v673 = vlaneseq
      %v674 = vshrl.u32 %v673, 7
      %v675 = vsub.s32 0, %v674
      %v676 = vrot.slane %v671, %v675
      %v678 = vmul.f32 %v667, %v676
      %v679 = vmul.f32 %v668, %v676
      %v680 = vmul.f32 %v669, %v676
      %v681 = vmul.f32 %v670, %v676
      %v682 = vld [vmem:[%s4] sm:$0x1]
      %v684 = vlaneseq
      %v685 = vshrl.u32 %v684, 7
      %v686 = vsub.s32 0, %v685
      %v687 = vrot.slane %v682, %v686
      %v689 = vadd.f32 %v678, %v687
      %v690 = vadd.f32 %v679, %v687
      %v691 = vadd.f32 %v680, %v687
      %v692 = vadd.f32 %v681, %v687
      %v693 = vmul.f32 %v689, 0.5
      %v694 = vmul.f32 %v690, 0.5
      %v695 = vmul.f32 %v691, 0.5
      %v696 = vmul.f32 %v692, 0.5
      %v697 = vmul.f32 %v689, 0.70710677
      %v698 = vmul.f32 %v690, 0.70710677
      %v699 = vmul.f32 %v691, 0.70710677
      %v700 = vmul.f32 %v692, 0.70710677
      %v701 = vand.u32 2147483647, %v697
      %v702 = vand.u32 2147483647, %v698
      %v703 = vand.u32 2147483647, %v699
      %v704 = vand.u32 2147483647, %v700
      %v705 = vmul.f32 %v701, 0.3275911
      %v706 = vmul.f32 %v702, 0.3275911
      %v707 = vmul.f32 %v703, 0.3275911
      %v708 = vmul.f32 %v704, 0.3275911
      %v709 = vadd.f32 %v705, 1.0
      %v710 = vadd.f32 %v706, 1.0
      %v711 = vadd.f32 %v707, 1.0
      %v712 = vadd.f32 %v708, 1.0
      %v713 = vrcp.pop %v709
      %v714 = vmul.f32 1.0, %v713
      %v715 = vrcp.pop %v710
      %v716 = vmul.f32 1.0, %v715
      %v717 = vrcp.pop %v711
      %v718 = vmul.f32 1.0, %v717
      %v719 = vrcp.pop %v712
      %v720 = vmul.f32 1.0, %v719
      %v721 = vmul.f32 %v714, 1.0614054
      %v722 = vmul.f32 %v716, 1.0614054
      %v723 = vmul.f32 %v718, 1.0614054
      %v724 = vmul.f32 %v720, 1.0614054
      %v725 = vadd.f32 %v721, -1.4531521
      %v726 = vadd.f32 %v722, -1.4531521
      %v727 = vadd.f32 %v723, -1.4531521
      %v728 = vadd.f32 %v724, -1.4531521
      %v729 = vmul.f32 %v725, %v714
      %v730 = vmul.f32 %v726, %v716
      %v731 = vmul.f32 %v727, %v718
      %v732 = vmul.f32 %v728, %v720
      %v733 = vadd.f32 %v729, 1.4214138
      %v734 = vadd.f32 %v730, 1.4214138
      %v735 = vadd.f32 %v731, 1.4214138
      %v736 = vadd.f32 %v732, 1.4214138
      %v737 = vmul.f32 %v733, %v714
      %v738 = vmul.f32 %v734, %v716
      %v739 = vmul.f32 %v735, %v718
      %v740 = vmul.f32 %v736, %v720
      %v741 = vadd.f32 %v737, -0.28449672
      %v742 = vadd.f32 %v738, -0.28449672
      %v743 = vadd.f32 %v739, -0.28449672
      %v744 = vadd.f32 %v740, -0.28449672
      %v745 = vmul.f32 %v741, %v714
      %v746 = vmul.f32 %v742, %v716
      %v747 = vmul.f32 %v743, %v718
      %v748 = vmul.f32 %v744, %v720
      %v749 = vadd.f32 %v745, 0.2548296
      %v750 = vadd.f32 %v746, 0.2548296
      %v751 = vadd.f32 %v747, 0.2548296
      %v752 = vadd.f32 %v748, 0.2548296
      %v753 = vmul.f32 %v749, %v714
      %v754 = vmul.f32 %v750, %v716
      %v755 = vmul.f32 %v751, %v718
      %v756 = vmul.f32 %v752, %v720
      %v757 = vsub.f32 0.0, %v701
      %v758 = vsub.f32 0.0, %v702
      %v759 = vsub.f32 0.0, %v703
      %v760 = vsub.f32 0.0, %v704
      %v761 = vmul.f32 %v757, %v701
      %v762 = vmul.f32 %v758, %v702
      %v763 = vmul.f32 %v759, %v703
      %v764 = vmul.f32 %v760, %v704
      %v765 = vmul.f32 %v761, 1.442695
      %v766 = vpow.pop %v765
      %v767 = vmul.f32 %v762, 1.442695
      %v768 = vpow.pop %v767
      %v769 = vmul.f32 %v763, 1.442695
      %v770 = vpow.pop %v769
      %v771 = vmul.f32 %v764, 1.442695
      %v772 = vpow.pop %v771
      %v773 = vmul.f32 %v753, %v766
      %v774 = vmul.f32 %v754, %v768
      %v775 = vmul.f32 %v755, %v770
      %v776 = vmul.f32 %v756, %v772
      %v777 = vsub.f32 1.0, %v773
      %v778 = vsub.f32 1.0, %v774
      %v779 = vsub.f32 1.0, %v775
      %v780 = vsub.f32 1.0, %v776
      %vm781 = vcmp.ge.f32.partialorder %v697, 0.0
      %vm782 = vcmp.ge.f32.partialorder %v698, 0.0
      %vm783 = vcmp.ge.f32.partialorder %v699, 0.0
      %vm784 = vcmp.ge.f32.partialorder %v700, 0.0
      %v785 = vsub.f32 0.0, %v777
      %v786 = vsub.f32 0.0, %v778
      %v787 = vsub.f32 0.0, %v779
      %v788 = vsub.f32 0.0, %v780
      %v789 = vsel %vm781, %v777, %v785
      %v790 = vsel %vm782, %v778, %v786
      %v791 = vsel %vm783, %v779, %v787
      %v792 = vsel %vm784, %v780, %v788
      %v793 = vadd.f32 %v789, 1.0
      %v794 = vadd.f32 %v790, 1.0
      %v795 = vadd.f32 %v791, 1.0
      %v796 = vadd.f32 %v792, 1.0
      %v797 = vmul.f32 %v693, %v793
      %v798 = vmul.f32 %v694, %v794
      %v799 = vmul.f32 %v695, %v795
      %v800 = vmul.f32 %v696, %v796
      %801 = vst.msk [vmem:[%s224] sm:$0xff] %vm611, %v797
      %802 = vst.msk [vmem:[%s224 + $0x8] sm:$0xff] %vm611, %v798
      %803 = vst.msk [vmem:[%s224 + $0x10] sm:$0xff] %vm611, %v799
      %804 = vst.msk [vmem:[%s224 + $0x18] sm:$0xff] %vm611, %v800
      %p805 = scmp.lt.s32.totalorder %s16, 1
      %s806 = scalar_select %p805, %s16, 1
      %s807 = smul.addr %s806, 4
      %s808 = smul.addr %s807, 8
      %s809 = scalar_lea.vmem %s5, %s808
      // Predicated region
      $region41: #{tpu_custom_call.1} parent=39 // pred_check
        %p810 = pneg %p144
      $region42: #{tpu_custom_call.1} parent=39 // pred_check_branch
        %812 = sbr.rel (%p810) target = $region44
      $region43: #{tpu_custom_call.1} parent=39 // pred_region
        _
      $region44: #{tpu_custom_call.1} parent=39 // pred_fallthru
        _
    $region40: #{tpu_custom_call.1} parent=5 // pred_fallthru
      _
    %p813 = scmp.le.s32.totalorder 2, %s11
    // Predicated region
    $region45: #{tpu_custom_call.1} parent=5 // pred_check
      %p814 = pneg %p813
    $region46: #{tpu_custom_call.1} parent=5 // pred_check_branch
      %816 = sbr.rel (%p814) target = $region48
    $region47: #{tpu_custom_call.1} parent=5 // pred_region
      %s817 = ssub.s32 %s11, 2
      // Predicated region
      $region49: #{tpu_custom_call.1} parent=47 // pred_check
        %p818 = pneg %p150
      $region50: #{tpu_custom_call.1} parent=47 // pred_check_branch
        %820 = sbr.rel (%p818) target = $region52
      $region51: #{tpu_custom_call.1} parent=47 // pred_region
        %p821 = scmp.lt.s32.totalorder %s17, 1
        %s822 = scalar_select %p821, %s17, 1
        %s823 = smul.addr %s822, 4
        %s824 = smul.addr %s823, 8
        %s825 = scalar_lea.vmem %s5, %s824
      $region52: #{tpu_custom_call.1} parent=47 // pred_fallthru
        _
    $region48: #{tpu_custom_call.1} parent=5 // pred_fallthru
      _
  $region6: #{tpu_custom_call.1} parent=0 // loop_footer
    %s15 = sadd.s32 1, %s11
  $region7: #{tpu_custom_call.1} parent=0 // loop_footer_branch
    %10 = sbr.rel target = $region3
  $region8: #{tpu_custom_call.1} parent=0 // loop_exit
    _

</llo_original>
